<compile_context>
chip_gen: v7x
topology: tpu7x:2x2x1
jax: 0.10.0
libtpu: 0.0.40
codegen_flags: <defaults>
</compile_context>

<pallas_src>
import jax
import jax.numpy as jnp
from jax.experimental import pallas as pl
from jax.experimental.pallas import tpu as pltpu

LANES = 128


def xornet_kernel(p_ref, x_ref, o_ref):
    # p_ref: (17,) f32 in SMEM.
    #   [0:8]   w1 row-major, w1[i, j] = p[i*4 + j]   (fc1.weight.T, shape (2,4))
    #   [8:12]  b1
    #   [12:16] w2 (fc2.weight.T flattened, shape (4,1))
    #   [16]    b2
    # x_ref: (2, TR, 128)  -- feature axis first, batch packed on (sublane, lane)
    # o_ref: (TR, 128)     -- dense, unmasked stores
    x0 = x_ref[0]                        # (TR, 128) dense slab
    x1 = x_ref[1]                        # (TR, 128)

    # fc1 + sigmoid: fully unrolled broadcast FMAs on the VPU (K=2, N=4).
    h = []
    for j in range(4):
        hj = x0 * p_ref[j] + x1 * p_ref[4 + j] + p_ref[8 + j]
        # Kernel is HBM-bound; exact sigmoid (exp on EUP) is fine.  If it ever
        # became EUP/VALU-visible, swap for exp(-x) + pl.reciprocal(approx=True).
        h.append(jax.nn.sigmoid(hj))     # (TR, 128)

    # fc2 + sigmoid: 4-term broadcast FMA (K=4, N=1).
    y = (h[0] * p_ref[12] + h[1] * p_ref[13]
         + h[2] * p_ref[14] + h[3] * p_ref[15] + p_ref[16])
    o_ref[...] = jax.nn.sigmoid(y)       # (TR, 128) dense store


def pack_params(w1, b1, w2, b2):
    """Pack all 17 parameters into one small SMEM-friendly f32 array."""
    return jnp.concatenate([
        w1.reshape(-1), b1.reshape(-1), w2.reshape(-1), b2.reshape(-1)
    ]).astype(jnp.float32)               # (17,)


def _choose_tiling(batch, max_rows_per_tile=64):
    """Pick (rows, tile_rows) for a batch of `batch` samples."""
    rows = pl.cdiv(batch, LANES)
    if rows < 16:
        # Single grid step; block row-dim equals the full array dim, so the
        # (8,128) divisibility rule does not apply and no row rounding is needed.
        return rows, rows
    # Tile the sublane-row axis: multiples of 8 rows, >=2 tiles (v7x megacore),
    # <= max_rows_per_tile rows per tile to amortize the ~0.35 us/step overhead.
    rows = ((rows + 7) // 8) * 8
    tr = min(max_rows_per_tile, max(8, (rows // 2 // 8) * 8))
    while rows % tr:
        tr -= 8
    return rows, tr


def xornet_forward_packed(x_packed, params, *, tile_rows):
    """Core entry point: x_packed is (2, ROWS, 128) f32, params is (17,) f32.

    Returns (ROWS, 128) f32.  Producers that can emit the packed layout should
    call this directly and skip the (B, 2) adapter below.
    """
    rows = x_packed.shape[1]
    assert rows % tile_rows == 0
    num_tiles = rows // tile_rows
    n = rows * LANES

    return pl.pallas_call(
        xornet_kernel,
        out_shape=jax.ShapeDtypeStruct((rows, LANES), jnp.float32),
        grid_spec=pltpu.PrefetchScalarGridSpec(
            num_scalar_prefetch=0,
            grid=(num_tiles,),
            in_specs=[
                # One tiny transfer for all parameters, read as scalars.
                pl.BlockSpec(memory_space=pltpu.MemorySpace.SMEM),
                # Dense input tile: 2 feature planes x (tile_rows, 128) batch.
                pl.BlockSpec((2, tile_rows, LANES), lambda i: (0, i, 0)),
            ],
            # Dense, unmasked output tile.
            out_specs=pl.BlockSpec((tile_rows, LANES), lambda i: (i, 0)),
        ),
        compiler_params=pltpu.CompilerParams(
            # Batch tiles are independent -> shard across TCs on v7x.
            dimension_semantics=("parallel",)),
        cost_estimate=pl.CostEstimate(        # advisory only
            flops=24 * n,                     # 16 (fc1) + 8 (fc2) per sample
            transcendentals=10 * n,           # 5 sigmoids ~ exp + recip each
            bytes_accessed=3 * n * 4 + 17 * 4),
    )(params, x_packed)


def xornet_forward(x, w1, b1, w2, b2, *, max_rows_per_tile=64):
    """Adapter: x is (B, 2) float32.  Returns (B, 1) float32.

    w1: (2, 4) = fc1.weight.T, b1: (4,), w2: (4, 1) = fc2.weight.T, b2: (1,).
    """
    B = x.shape[0]
    rows, tile_rows = _choose_tiling(B, max_rows_per_tile)
    bp = rows * LANES

    # Layout plumbing only: transpose + (tail-only) pad + reshape.  No full
    # zero-init/scatter copy; when B is already lane/row aligned the pad is a
    # no-op and this is pure reshaping.
    x_t = x.astype(jnp.float32).T                     # (2, B)
    if bp != B:
        x_t = jnp.pad(x_t, ((0, 0), (0, bp - B)))
    x_packed = x_t.reshape(2, rows, LANES)

    params = pack_params(w1, b1, w2, b2)

    out = xornet_forward_packed(x_packed, params, tile_rows=tile_rows)
    return out.reshape(bp)[:B].reshape(B, 1)


def init_params(key):
    """Deterministic init matching torch.nn.Linear shapes (stored transposed)."""
    k1, k2, k3, k4 = jax.random.split(key, 4)
    bound1 = 1.0 / jnp.sqrt(2.0)
    bound2 = 1.0 / jnp.sqrt(4.0)
    w1 = jax.random.uniform(k1, (2, 4), jnp.float32, -bound1, bound1)  # fc1.weight.T
    b1 = jax.random.uniform(k2, (4,), jnp.float32, -bound1, bound1)    # fc1.bias
    w2 = jax.random.uniform(k3, (4, 1), jnp.float32, -bound2, bound2)  # fc2.weight.T
    b2 = jax.random.uniform(k4, (1,), jnp.float32, -bound2, bound2)    # fc2.bias
    return w1, b1, w2, b2


if __name__ == "__main__":
    key = jax.random.PRNGKey(0)
    pkey, xkey = jax.random.split(key)
    w1, b1, w2, b2 = init_params(pkey)

    # 4 canonical XOR corners + random points -> B = 512 (4 sublane rows x 128
    # lanes, single grid step, zero padding needed).
    corners = jnp.array([[0., 0.], [0., 1.], [1., 0.], [1., 1.]], jnp.float32)
    rand_x = jax.random.uniform(xkey, (508, 2), jnp.float32)
    x = jnp.concatenate([corners, rand_x], axis=0)  # (512, 2)

    out = xornet_forward(x, w1, b1, w2, b2)
    out = jax.block_until_ready(out)

    # Pure-JAX reference check.
    ref = jax.nn.sigmoid(jax.nn.sigmoid(x @ w1 + b1) @ w2 + b2)
    assert out.shape == (512, 1)
    assert jnp.allclose(out, ref, atol=1e-5), (out, ref)

    print("KERNEL_OK")
</pallas_src>

<mosaic_0001>
module attributes {stable_mosaic.version = 11 : i64} {
  func.func @xornet_kernel(%arg0: i32, %arg1: memref<17xf32, #tpu.memory_space<smem>>, %arg2: memref<2x4x128xf32, #tpu.memory_space<vmem>>, %arg3: memref<4x128xf32, #tpu.memory_space<vmem>>) attributes {dimension_semantics = [#tpu.dimension_semantics<parallel>], iteration_bounds = array<i64: 1>, scalar_prefetch = 0 : i64, scratch_operands = 0 : i64, tpu.core_type = #tpu.core_type<tc>, window_params = [{transform_indices = @transform_0, window_bounds = array<i64: 17>}, {transform_indices = @transform_1, window_bounds = array<i64: 2, 4, 128>}, {transform_indices = @transform_2, window_bounds = array<i64: 4, 128>}]} {
    %c0 = arith.constant 0 : index
    %c0_0 = arith.constant 0 : index
    %c0_1 = arith.constant 0 : index
    %0 = vector.load %arg2[%c0, %c0_0, %c0_1] : memref<2x4x128xf32, #tpu.memory_space<vmem>>, vector<1x4x128xf32>
    %1 = vector.shape_cast %0 : vector<1x4x128xf32> to vector<4x128xf32>
    %c1 = arith.constant 1 : index
    %c0_2 = arith.constant 0 : index
    %c0_3 = arith.constant 0 : index
    %2 = vector.load %arg2[%c1, %c0_2, %c0_3] : memref<2x4x128xf32, #tpu.memory_space<vmem>>, vector<1x4x128xf32>
    %3 = vector.shape_cast %2 : vector<1x4x128xf32> to vector<4x128xf32>
    %c0_4 = arith.constant 0 : index
    %4 = memref.load %arg1[%c0_4] : memref<17xf32, #tpu.memory_space<smem>>
    %5 = vector.broadcast %4 : f32 to vector<4x128xf32>
    %6 = arith.mulf %1, %5 : vector<4x128xf32>
    %c4 = arith.constant 4 : index
    %7 = memref.load %arg1[%c4] : memref<17xf32, #tpu.memory_space<smem>>
    %8 = vector.broadcast %7 : f32 to vector<4x128xf32>
    %9 = arith.mulf %3, %8 : vector<4x128xf32>
    %10 = arith.addf %6, %9 : vector<4x128xf32>
    %c8 = arith.constant 8 : index
    %11 = memref.load %arg1[%c8] : memref<17xf32, #tpu.memory_space<smem>>
    %12 = vector.broadcast %11 : f32 to vector<4x128xf32>
    %13 = arith.addf %10, %12 : vector<4x128xf32>
    %14 = arith.negf %13 : vector<4x128xf32>
    %15 = math.exp %14 : vector<4x128xf32>
    %cst = arith.constant 1.000000e+00 : f32
    %16 = vector.broadcast %cst : f32 to vector<4x128xf32>
    %17 = arith.addf %16, %15 : vector<4x128xf32>
    %18 = arith.divf %16, %17 : vector<4x128xf32>
    %c1_5 = arith.constant 1 : index
    %19 = memref.load %arg1[%c1_5] : memref<17xf32, #tpu.memory_space<smem>>
    %20 = vector.broadcast %19 : f32 to vector<4x128xf32>
    %21 = arith.mulf %1, %20 : vector<4x128xf32>
    %c5 = arith.constant 5 : index
    %22 = memref.load %arg1[%c5] : memref<17xf32, #tpu.memory_space<smem>>
    %23 = vector.broadcast %22 : f32 to vector<4x128xf32>
    %24 = arith.mulf %3, %23 : vector<4x128xf32>
    %25 = arith.addf %21, %24 : vector<4x128xf32>
    %c9 = arith.constant 9 : index
    %26 = memref.load %arg1[%c9] : memref<17xf32, #tpu.memory_space<smem>>
    %27 = vector.broadcast %26 : f32 to vector<4x128xf32>
    %28 = arith.addf %25, %27 : vector<4x128xf32>
    %29 = arith.negf %28 : vector<4x128xf32>
    %30 = math.exp %29 : vector<4x128xf32>
    %cst_6 = arith.constant 1.000000e+00 : f32
    %31 = vector.broadcast %cst_6 : f32 to vector<4x128xf32>
    %32 = arith.addf %31, %30 : vector<4x128xf32>
    %33 = arith.divf %31, %32 : vector<4x128xf32>
    %c2 = arith.constant 2 : index
    %34 = memref.load %arg1[%c2] : memref<17xf32, #tpu.memory_space<smem>>
    %35 = vector.broadcast %34 : f32 to vector<4x128xf32>
    %36 = arith.mulf %1, %35 : vector<4x128xf32>
    %c6 = arith.constant 6 : index
    %37 = memref.load %arg1[%c6] : memref<17xf32, #tpu.memory_space<smem>>
    %38 = vector.broadcast %37 : f32 to vector<4x128xf32>
    %39 = arith.mulf %3, %38 : vector<4x128xf32>
    %40 = arith.addf %36, %39 : vector<4x128xf32>
    %c10 = arith.constant 10 : index
    %41 = memref.load %arg1[%c10] : memref<17xf32, #tpu.memory_space<smem>>
    %42 = vector.broadcast %41 : f32 to vector<4x128xf32>
    %43 = arith.addf %40, %42 : vector<4x128xf32>
    %44 = arith.negf %43 : vector<4x128xf32>
    %45 = math.exp %44 : vector<4x128xf32>
    %cst_7 = arith.constant 1.000000e+00 : f32
    %46 = vector.broadcast %cst_7 : f32 to vector<4x128xf32>
    %47 = arith.addf %46, %45 : vector<4x128xf32>
    %48 = arith.divf %46, %47 : vector<4x128xf32>
    %c3 = arith.constant 3 : index
    %49 = memref.load %arg1[%c3] : memref<17xf32, #tpu.memory_space<smem>>
    %50 = vector.broadcast %49 : f32 to vector<4x128xf32>
    %51 = arith.mulf %1, %50 : vector<4x128xf32>
    %c7 = arith.constant 7 : index
    %52 = memref.load %arg1[%c7] : memref<17xf32, #tpu.memory_space<smem>>
    %53 = vector.broadcast %52 : f32 to vector<4x128xf32>
    %54 = arith.mulf %3, %53 : vector<4x128xf32>
    %55 = arith.addf %51, %54 : vector<4x128xf32>
    %c11 = arith.constant 11 : index
    %56 = memref.load %arg1[%c11] : memref<17xf32, #tpu.memory_space<smem>>
    %57 = vector.broadcast %56 : f32 to vector<4x128xf32>
    %58 = arith.addf %55, %57 : vector<4x128xf32>
    %59 = arith.negf %58 : vector<4x128xf32>
    %60 = math.exp %59 : vector<4x128xf32>
    %cst_8 = arith.constant 1.000000e+00 : f32
    %61 = vector.broadcast %cst_8 : f32 to vector<4x128xf32>
    %62 = arith.addf %61, %60 : vector<4x128xf32>
    %63 = arith.divf %61, %62 : vector<4x128xf32>
    %c12 = arith.constant 12 : index
    %64 = memref.load %arg1[%c12] : memref<17xf32, #tpu.memory_space<smem>>
    %65 = vector.broadcast %64 : f32 to vector<4x128xf32>
    %66 = arith.mulf %18, %65 : vector<4x128xf32>
    %c13 = arith.constant 13 : index
    %67 = memref.load %arg1[%c13] : memref<17xf32, #tpu.memory_space<smem>>
    %68 = vector.broadcast %67 : f32 to vector<4x128xf32>
    %69 = arith.mulf %33, %68 : vector<4x128xf32>
    %70 = arith.addf %66, %69 : vector<4x128xf32>
    %c14 = arith.constant 14 : index
    %71 = memref.load %arg1[%c14] : memref<17xf32, #tpu.memory_space<smem>>
    %72 = vector.broadcast %71 : f32 to vector<4x128xf32>
    %73 = arith.mulf %48, %72 : vector<4x128xf32>
    %74 = arith.addf %70, %73 : vector<4x128xf32>
    %c15 = arith.constant 15 : index
    %75 = memref.load %arg1[%c15] : memref<17xf32, #tpu.memory_space<smem>>
    %76 = vector.broadcast %75 : f32 to vector<4x128xf32>
    %77 = arith.mulf %63, %76 : vector<4x128xf32>
    %78 = arith.addf %74, %77 : vector<4x128xf32>
    %c16 = arith.constant 16 : index
    %79 = memref.load %arg1[%c16] : memref<17xf32, #tpu.memory_space<smem>>
    %80 = vector.broadcast %79 : f32 to vector<4x128xf32>
    %81 = arith.addf %78, %80 : vector<4x128xf32>
    %82 = arith.negf %81 : vector<4x128xf32>
    %83 = math.exp %82 : vector<4x128xf32>
    %cst_9 = arith.constant 1.000000e+00 : f32
    %84 = vector.broadcast %cst_9 : f32 to vector<4x128xf32>
    %85 = arith.addf %84, %83 : vector<4x128xf32>
    %86 = arith.divf %84, %85 : vector<4x128xf32>
    %c0_10 = arith.constant 0 : index
    %c0_11 = arith.constant 0 : index
    %87 = vector.load %arg3[%c0_10, %c0_11] : memref<4x128xf32, #tpu.memory_space<vmem>>, vector<4x128xf32>
    tpu.vector_store %arg3[%c0_10, %c0_11], %86 {strides = array<i32>} : memref<4x128xf32, #tpu.memory_space<vmem>>, vector<4x128xf32>,
    return
  }
  func.func @transform_0(%arg0: i32) -> i32 {
    %c0_i32 = arith.constant 0 : i32
    %c0_i32_0 = arith.constant 0 : i32
    return %c0_i32 : i32
  }
  func.func @transform_1(%arg0: i32) -> (i32, i32, i32) {
    %c0_i32 = arith.constant 0 : i32
    %c0_i32_0 = arith.constant 0 : i32
    %c0_i32_1 = arith.constant 0 : i32
    return %c0_i32, %arg0, %c0_i32_0 : i32, i32, i32
  }
  func.func @transform_2(%arg0: i32) -> (i32, i32) {
    %c0_i32 = arith.constant 0 : i32
    %c0_i32_0 = arith.constant 0 : i32
    return %arg0, %c0_i32 : i32, i32
  }
}

</mosaic_0001>

<llo_original>
// kernel: tpu_custom_call.1
$region0: #{tpu_custom_call.1}
  #allocation0 [shape = 'u32[]', space=smem, size = 0x4, offset = 0x4, fixed_abs, tag = 'smem constant byte address 0x4 - core index']
  #allocation1 [shape = 'u32[144,128]{1,0:T(1,128)}', space=vmem, size = 0x12000, scoped, tag = 'internal scratch']
  %s0 = inlined_call_operand.hbm [shape: f32[17], index: 0, kind: input, shape index: {}]
  %s1 = inlined_call_operand.hbm [shape: f32[2,4,128], index: 1, kind: input, shape index: {}]
  %s2 = inlined_call_operand.hbm [shape: f32[4,128], index: 2, kind: output, shape index: {}]
  %s3 = sld [smem:[#allocation0]]
  $region26: #{tpu_custom_call.1} parent=0
    _
  %s5 = ssub.s32 1, %s3
  %s6 = scalar_select 0, %s5, %s3
  $region1: #{tpu_custom_call.1} parent=0
    #allocation2 [shape = 'u8[512]{0}', space=smem, size = 0x200, scoped, tag = 'input window, operand 0, single buffered']
    #allocation3 [shape = 's32[1]{0}', space=sflag, size = 0x4, scoped, tag = 'scoped memory for tpu_custom_call.1']
    #allocation4 [shape = 's32[1]{0}', space=sflag, size = 0x4, scoped, tag = 'scoped memory for tpu_custom_call.1']
    #allocation5 [shape = 's32[1]{0}', space=sflag, size = 0x4, scoped, tag = 'scoped memory for tpu_custom_call.1']
    #allocation6 [shape = 'u8[4096]{0}', space=vmem, size = 0x1000, scoped, tag = 'input window, operand 1, single buffered']
    #allocation7 [shape = 'u8[2048]{0}', space=vmem, size = 0x800, scoped, tag = 'output window, operand 0, single buffered']
    %7 = vsyncpa [#allocation5], 0
    %8 = vsyncpa [#allocation3], 0
    %9 = vsyncpa [#allocation4], 0
    // Predicated region
    $region2: #{tpu_custom_call.1} parent=1 // pred_check
      _
    $region3: #{tpu_custom_call.1} parent=1 // pred_check_branch
      %11 = sbr.rel (0) target = $region5
    $region4: #{tpu_custom_call.1} parent=1 // pred_region
      %s13 = ssub.s32 16, 16
      %14 = vsyncadd [#allocation5], %s13
      %17 = dma.hbm_to_smem %s0, 16, [#allocation2], [#allocation5]
    $region5: #{tpu_custom_call.1} parent=1 // pred_fallthru
      _
    // Predicated region
    $region6: #{tpu_custom_call.1} parent=1 // pred_check
      _
    $region7: #{tpu_custom_call.1} parent=1 // pred_check_branch
      %19 = sbr.rel (0) target = $region9
    $region8: #{tpu_custom_call.1} parent=1 // pred_region
      %s21 = ssub.s32 128, 128
      %22 = vsyncadd [#allocation3], %s21
      %s23 = sshll.u32 [#allocation6], 4
      %s24 = int_to_ptr.vmem [resolvable:$true] %s23
      %29 = dma.hbm_to_vmem [thread:$0]  %s1, 128, %s24, [#allocation3], 64, 64, 4
    $region9: #{tpu_custom_call.1} parent=1 // pred_fallthru
      _
    // Predicated region
    $region10: #{tpu_custom_call.1} parent=1 // pred_check
      _
    $region11: #{tpu_custom_call.1} parent=1 // pred_check_branch
      %31 = sbr.rel (0) target = $region13
    $region12: #{tpu_custom_call.1} parent=1 // pred_region
      %32 = dma.done [#allocation5], 16
    $region13: #{tpu_custom_call.1} parent=1 // pred_fallthru
      _
    // Predicated region
    $region14: #{tpu_custom_call.1} parent=1 // pred_check
      _
    $region15: #{tpu_custom_call.1} parent=1 // pred_check_branch
      %34 = sbr.rel (0) target = $region17
    $region16: #{tpu_custom_call.1} parent=1 // pred_region
      %35 = dma.done [#allocation3], 128
    $region17: #{tpu_custom_call.1} parent=1 // pred_fallthru
      _
    %36 = sfence
    %v37 = vld [vmem:[#allocation6] sm:$0xf]
    %s38 = scalar_lea.vmem [#allocation6], 4
    %v39 = vld [vmem:[%s38] sm:$0xf]
    %s40 = sld [smem:[#allocation2]]
    %v41 = vstv %s40
    %v42 = vmul.f32 %v37, %v41
    %s43 = sld [smem:[#allocation2 + $0x4]]
    %v44 = vstv %s43
    %v45 = vmul.f32 %v39, %v44
    %v46 = vadd.f32 %v42, %v45
    %s47 = sld [smem:[#allocation2 + $0x8]]
    %v48 = vstv %s47
    %v49 = vadd.f32 %v46, %v48
    %v50 = vxor.u32 %v49, 2147483648
    %v51 = vmul.f32 %v50, 1.442695
    %v52 = vpow.pop %v51
    %v53 = vadd.f32 %v52, 1.0
    %v54 = vrcp.pop %v53
    %v55 = vmul.f32 1.0, %v54
    %s56 = sld [smem:[#allocation2 + $0x1]]
    %v57 = vstv %s56
    %v58 = vmul.f32 %v37, %v57
    %s59 = sld [smem:[#allocation2 + $0x5]]
    %v60 = vstv %s59
    %v61 = vmul.f32 %v39, %v60
    %v62 = vadd.f32 %v58, %v61
    %s63 = sld [smem:[#allocation2 + $0x9]]
    %v64 = vstv %s63
    %v65 = vadd.f32 %v62, %v64
    %v66 = vxor.u32 %v65, 2147483648
    %v67 = vmul.f32 %v66, 1.442695
    %v68 = vpow.pop %v67
    %v69 = vadd.f32 %v68, 1.0
    %v70 = vrcp.pop %v69
    %v71 = vmul.f32 1.0, %v70
    %s72 = sld [smem:[#allocation2 + $0x2]]
    %v73 = vstv %s72
    %v74 = vmul.f32 %v37, %v73
    %s75 = sld [smem:[#allocation2 + $0x6]]
    %v76 = vstv %s75
    %v77 = vmul.f32 %v39, %v76
    %v78 = vadd.f32 %v74, %v77
    %s79 = sld [smem:[#allocation2 + $0xa]]
    %v80 = vstv %s79
    %v81 = vadd.f32 %v78, %v80
    %v82 = vxor.u32 %v81, 2147483648
    %v83 = vmul.f32 %v82, 1.442695
    %v84 = vpow.pop %v83
    %v85 = vadd.f32 %v84, 1.0
    %v86 = vrcp.pop %v85
    %v87 = vmul.f32 1.0, %v86
    %s88 = sld [smem:[#allocation2 + $0x3]]
    %v89 = vstv %s88
    %v90 = vmul.f32 %v37, %v89
    %s91 = sld [smem:[#allocation2 + $0x7]]
    %v92 = vstv %s91
    %v93 = vmul.f32 %v39, %v92
    %v94 = vadd.f32 %v90, %v93
    %s95 = sld [smem:[#allocation2 + $0xb]]
    %v96 = vstv %s95
    %v97 = vadd.f32 %v94, %v96
    %v98 = vxor.u32 %v97, 2147483648
    %v99 = vmul.f32 %v98, 1.442695
    %v100 = vpow.pop %v99
    %v101 = vadd.f32 %v100, 1.0
    %v102 = vrcp.pop %v101
    %v103 = vmul.f32 1.0, %v102
    %s104 = sld [smem:[#allocation2 + $0xc]]
    %v105 = vstv %s104
    %v106 = vmul.f32 %v55, %v105
    %s107 = sld [smem:[#allocation2 + $0xd]]
    %v108 = vstv %s107
    %v109 = vmul.f32 %v71, %v108
    %v110 = vadd.f32 %v106, %v109
    %s111 = sld [smem:[#allocation2 + $0xe]]
    %v112 = vstv %s111
    %v113 = vmul.f32 %v87, %v112
    %v114 = vadd.f32 %v110, %v113
    %s115 = sld [smem:[#allocation2 + $0xf]]
    %v116 = vstv %s115
    %v117 = vmul.f32 %v103, %v116
    %v118 = vadd.f32 %v114, %v117
    %s119 = sld [smem:[#allocation2 + $0x10]]
    %v120 = vstv %s119
    %v121 = vadd.f32 %v118, %v120
    %v122 = vxor.u32 %v121, 2147483648
    %v123 = vmul.f32 %v122, 1.442695
    %v124 = vpow.pop %v123
    %v125 = vadd.f32 %v124, 1.0
    %v126 = vrcp.pop %v125
    %v127 = vmul.f32 1.0, %v126
    %128 = vst [vmem:[#allocation7] sm:$0xf] %v127
    // Predicated region
    $region18: #{tpu_custom_call.1} parent=1 // pred_check
      _
    $region19: #{tpu_custom_call.1} parent=1 // pred_check_branch
      %130 = sbr.rel (0) target = $region21
    $region20: #{tpu_custom_call.1} parent=1 // pred_region
      %s132 = ssub.s32 64, 64
      %133 = vsyncadd [#allocation4], %s132
      %s135 = sshll.u32 [#allocation7], 4
      %s136 = int_to_ptr.vmem [resolvable:$true] %s135
      %138 = dma.vmem_to_hbm [thread:$0]  %s136, 64, %s2, [#allocation4]
    $region21: #{tpu_custom_call.1} parent=1 // pred_fallthru
      _
    // Predicated region
    $region22: #{tpu_custom_call.1} parent=1 // pred_check
      _
    $region23: #{tpu_custom_call.1} parent=1 // pred_check_branch
      %140 = sbr.rel (0) target = $region25
    $region24: #{tpu_custom_call.1} parent=1 // pred_region
      %141 = dma.done [#allocation4], 64
    $region25: #{tpu_custom_call.1} parent=1 // pred_fallthru
      _
    %142 = vsyncpa [#allocation3], 1
    %143 = vsyncpa [#allocation4], 1
    %144 = vsyncpa [#allocation5], 1

</llo_original>
